<compile_context>
chip_gen: v6e
topology: v6e:2x2x1
jax: 0.10.0
libtpu: 0.0.40
codegen_flags: <defaults>
</compile_context>

<pallas_src>
import jax
import jax.numpy as jnp
from jax.experimental import pallas as pl
from jax.experimental.pallas import tpu as pltpu


_SEED_HASH = -1640531535        # 0x9E3779B1 as signed int32 (golden-ratio hash)
_FAST_PATH_MAX_ELEMS = 16384    # launch + DMA prologue dominate below this size


# ----------------------------- kernels --------------------------------------


def _sampler_kernel_tpu(seed_ref, mean_ref, var_ref, out_ref):
    """eps ~ N(0,1) drawn in-kernel on the TPU hardware PRNG."""
    # Distinct, hashed stream per grid tile (decorrelates megacore halves too).
    pltpu.prng_seed(seed_ref[0] + pl.program_id(0) * _SEED_HASH)
    eps = pltpu.stateful_normal(mean_ref.shape, jnp.float32)

    mean = mean_ref[...].astype(jnp.float32)      # in-kernel cast (VPU, cheap)
    log_var = var_ref[...].astype(jnp.float32)
    out_ref[...] = (mean + jnp.exp(0.5 * log_var) * eps).astype(out_ref.dtype)


def _sampler_kernel_eps(mean_ref, var_ref, eps_ref, out_ref):
    """Portable path: eps generated outside the kernel (CPU / interpret)."""
    mean = mean_ref[...].astype(jnp.float32)
    log_var = var_ref[...].astype(jnp.float32)
    eps = eps_ref[...].astype(jnp.float32)
    out_ref[...] = (mean + jnp.exp(0.5 * log_var) * eps).astype(out_ref.dtype)


# ----------------------------- sizing helpers --------------------------------


def _vmem_budget_bytes():
    """Per-generation VMEM budget for the kernel's working set."""
    try:
        kind = jax.devices()[0].device_kind.lower()
    except Exception:
        kind = ""
    if "v5 lite" in kind or "v5e" in kind or "v5litepod" in kind:
        return 8 * 1024 * 1024      # v5e: 16 MiB scoped-VMEM default
    if "v6" in kind:
        return 16 * 1024 * 1024     # v6e: 32 MiB scoped default, 128 MiB physical
    return 20 * 1024 * 1024         # v7x / newer: under 32 MiB scoped, 64 MiB physical


def _choose_layout(batch, dim_pad):
    """Given a lane-dense padded width, optionally fold to a wider slab."""
    if dim_pad >= 512:
        return (batch, dim_pad)
    total = batch * dim_pad
    for c in (512, 256):
        if c > dim_pad and total % c == 0:
            return (total // c, c)
    return (batch, dim_pad)


def _choose_row_tile(rows, cols, in_itemsize, out_itemsize):
    """Row tile sized from actual itemsizes, forcing >= 2 grid steps when possible."""
    budget = _vmem_budget_bytes()
    # Double-buffered mean/var (input dtype) + out (output dtype), plus the
    # single-buffered f32 eps temporary materialized by stateful_normal.
    bytes_per_row = cols * (2 * (2 * in_itemsize + out_itemsize) + 4)
    max_rows = max(8, budget // max(1, bytes_per_row))
    tb = min(rows, max_rows)
    # With enough work, cap the tile so the grid has >= 2 steps: both v7x
    # TensorCores engage and the DMA/compute pipeline gets overlap.
    if rows >= 16:
        tb = min(tb, max(8, (pl.cdiv(rows, 2) // 8) * 8))
    if tb >= rows:
        return rows                     # one block: full dims always legal
    return max(8, (tb // 8) * 8)        # sublane-aligned tile


# ----------------------------- wrapper ---------------------------------------


def gaussian_sampler(mean: jax.Array, variance: jax.Array, seed: int,
                     *, force_pallas: bool = False) -> jax.Array:
    assert mean.shape == variance.shape and mean.ndim == 2
    B, D = mean.shape
    out_dtype = mean.dtype

    # Small-problem fast path: at vreg scale the pallas_call is entirely
    # launch/DMA-prologue bound; a fused XLA elementwise op is strictly faster.
    if not force_pallas and B * D <= _FAST_PATH_MAX_ELEMS:
        eps = jax.random.normal(jax.random.PRNGKey(seed), (B, D), dtype=jnp.float32)
        out = mean.astype(jnp.float32) + jnp.exp(0.5 * variance.astype(jnp.float32)) * eps
        return out.astype(out_dtype)

    # Pad the last dim to a multiple of 128 (zeros: exp(0)=1, finite, sliced
    # off afterwards) so stores stay on the unmasked lane-dense path and the
    # VMEM-budgeted tiling is always valid.
    D_pad = ((D + 127) // 128) * 128
    if D_pad != D:
        pad = ((0, 0), (0, D_pad - D))
        mean_p = jnp.pad(mean, pad)
        var_p = jnp.pad(variance, pad)
    else:
        mean_p, var_p = mean, variance

    R, C = _choose_layout(B, D_pad)
    mean_w = mean_p.reshape(R, C)
    var_w = var_p.reshape(R, C)

    in_itemsize = jnp.dtype(mean.dtype).itemsize
    out_itemsize = jnp.dtype(out_dtype).itemsize

    on_tpu = jax.default_backend() == "tpu"

    if on_tpu:
        TB = _choose_row_tile(R, C, in_itemsize, out_itemsize)
        grid = (pl.cdiv(R, TB),)
        seed_arr = jnp.asarray([seed], dtype=jnp.int32)
        out = pl.pallas_call(
            _sampler_kernel_tpu,
            out_shape=jax.ShapeDtypeStruct((R, C), out_dtype),
            grid_spec=pltpu.PrefetchScalarGridSpec(
                num_scalar_prefetch=1,                  # seed -> SMEM
                grid=grid,
                in_specs=[
                    pl.BlockSpec((TB, C), lambda i, seed: (i, 0)),   # mean
                    pl.BlockSpec((TB, C), lambda i, seed: (i, 0)),   # log-variance
                ],
                out_specs=pl.BlockSpec((TB, C), lambda i, seed: (i, 0)),
            ),
            compiler_params=pltpu.CompilerParams(
                dimension_semantics=("parallel",),      # megacore-shard the grid
                has_side_effects=True,                  # stateful PRNG
            ),
        )(seed_arr, mean_w, var_w)
    else:
        # TODO(synk): pltpu.prng_seed/stateful_normal have no CPU/interpret
        # lowering; generate eps with XLA and reuse the same fused kernel.
        TB = _choose_row_tile(R, C, max(in_itemsize, 4), out_itemsize)
        grid = (pl.cdiv(R, TB),)
        eps = jax.random.normal(jax.random.PRNGKey(seed), (R, C), dtype=jnp.float32)
        out = pl.pallas_call(
            _sampler_kernel_eps,
            out_shape=jax.ShapeDtypeStruct((R, C), out_dtype),
            grid=grid,
            in_specs=[
                pl.BlockSpec((TB, C), lambda i: (i, 0)),
                pl.BlockSpec((TB, C), lambda i: (i, 0)),
                pl.BlockSpec((TB, C), lambda i: (i, 0)),
            ],
            out_specs=pl.BlockSpec((TB, C), lambda i: (i, 0)),
            compiler_params=pltpu.CompilerParams(
                dimension_semantics=("parallel",),
            ),
        )(mean_w, var_w, eps)

    out = out.reshape(B, D_pad)
    if D_pad != D:
        out = out[:, :D]
    return out


# ----------------------------- demo / sanity ---------------------------------

if __name__ == "__main__":
    # Module __init__ implies (batch_size, latent_dim) inputs.
    batch_size, latent_dim = 8, 128

    key = jax.random.PRNGKey(0)
    k_mean, k_var, k_m2, k_v2 = jax.random.split(key, 4)
    mean = jax.random.normal(k_mean, (batch_size, latent_dim), dtype=jnp.float32)
    variance = jax.random.normal(k_var, (batch_size, latent_dim), dtype=jnp.float32)

    # 1) Canonical shape through the Pallas kernel (forced past the small-size
    #    XLA fast path so the kernel itself is exercised).
    out = gaussian_sampler(mean, variance, seed=1234, force_pallas=True)
    out = jax.block_until_ready(out)
    assert out.shape == (batch_size, latent_dim)
    assert out.dtype == jnp.float32
    assert bool(jnp.all(jnp.isfinite(out)))
    # Statistical sanity: z = (out - mean) * exp(-0.5 * var) should be ~ N(0,1).
    z = (out - mean) * jnp.exp(-0.5 * variance)
    z_mean = float(jnp.mean(z))
    z_std = float(jnp.std(z))
    assert abs(z_mean) < 0.25, f"eps mean off: {z_mean}"
    assert 0.75 < z_std < 1.25, f"eps std off: {z_std}"

    # 2) Default path at the same shape takes the fused-XLA fast path.
    out_fast = jax.block_until_ready(gaussian_sampler(mean, variance, seed=1234))
    assert out_fast.shape == (batch_size, latent_dim)
    assert bool(jnp.all(jnp.isfinite(out_fast)))

    # 3) Ragged latent_dim exercises the pad-to-128 + slice path.
    mean_r = jax.random.normal(k_m2, (16, 100), dtype=jnp.float32)
    var_r = jax.random.normal(k_v2, (16, 100), dtype=jnp.float32)
    out_r = jax.block_until_ready(
        gaussian_sampler(mean_r, var_r, seed=7, force_pallas=True))
    assert out_r.shape == (16, 100)
    assert bool(jnp.all(jnp.isfinite(out_r)))

    # 4) Larger shape exercises row tiling with >= 2 grid steps (megacore).
    mean_l = jax.random.normal(k_m2, (256, 256), dtype=jnp.float32)
    var_l = jax.random.normal(k_v2, (256, 256), dtype=jnp.float32)
    out_l = jax.block_until_ready(gaussian_sampler(mean_l, var_l, seed=99))
    assert out_l.shape == (256, 256)
    assert bool(jnp.all(jnp.isfinite(out_l)))
    z_l = (out_l - mean_l) * jnp.exp(-0.5 * var_l)
    assert abs(float(jnp.mean(z_l))) < 0.1
    assert 0.85 < float(jnp.std(z_l)) < 1.15

    print("KERNEL_OK")
</pallas_src>

<mosaic_0001>
module attributes {stable_mosaic.version = 11 : i64} {
  func.func @_sampler_kernel_eps(%arg0: i32, %arg1: memref<2x512xf32, #tpu.memory_space<vmem>>, %arg2: memref<2x512xf32, #tpu.memory_space<vmem>>, %arg3: memref<2x512xf32, #tpu.memory_space<vmem>>, %arg4: memref<2x512xf32, #tpu.memory_space<vmem>>) attributes {dimension_semantics = [#tpu.dimension_semantics<parallel>], iteration_bounds = array<i64: 1>, scalar_prefetch = 0 : i64, scratch_operands = 0 : i64, tpu.core_type = #tpu.core_type<tc>, window_params = [{transform_indices = @transform_0, window_bounds = array<i64: 2, 512>}, {transform_indices = @transform_1, window_bounds = array<i64: 2, 512>}, {transform_indices = @transform_2, window_bounds = array<i64: 2, 512>}, {transform_indices = @transform_3, window_bounds = array<i64: 2, 512>}]} {
    %c0 = arith.constant 0 : index
    %c0_0 = arith.constant 0 : index
    %0 = vector.load %arg1[%c0, %c0_0] : memref<2x512xf32, #tpu.memory_space<vmem>>, vector<2x512xf32>
    %c0_1 = arith.constant 0 : index
    %c0_2 = arith.constant 0 : index
    %1 = vector.load %arg2[%c0_1, %c0_2] : memref<2x512xf32, #tpu.memory_space<vmem>>, vector<2x512xf32>
    %c0_3 = arith.constant 0 : index
    %c0_4 = arith.constant 0 : index
    %2 = vector.load %arg3[%c0_3, %c0_4] : memref<2x512xf32, #tpu.memory_space<vmem>>, vector<2x512xf32>
    %cst = arith.constant 5.000000e-01 : f32
    %3 = vector.broadcast %cst : f32 to vector<2x512xf32>
    %4 = arith.mulf %3, %1 : vector<2x512xf32>
    %5 = math.exp %4 : vector<2x512xf32>
    %6 = arith.mulf %5, %2 : vector<2x512xf32>
    %7 = arith.addf %0, %6 : vector<2x512xf32>
    %c0_5 = arith.constant 0 : index
    %c0_6 = arith.constant 0 : index
    %8 = vector.load %arg4[%c0_5, %c0_6] : memref<2x512xf32, #tpu.memory_space<vmem>>, vector<2x512xf32>
    tpu.vector_store %arg4[%c0_5, %c0_6], %7 {strides = array<i32>} : memref<2x512xf32, #tpu.memory_space<vmem>>, vector<2x512xf32>,
    return
  }
  func.func @transform_0(%arg0: i32) -> (i32, i32) {
    %c0_i32 = arith.constant 0 : i32
    %c0_i32_0 = arith.constant 0 : i32
    return %arg0, %c0_i32 : i32, i32
  }
  func.func @transform_1(%arg0: i32) -> (i32, i32) {
    %c0_i32 = arith.constant 0 : i32
    %c0_i32_0 = arith.constant 0 : i32
    return %arg0, %c0_i32 : i32, i32
  }
  func.func @transform_2(%arg0: i32) -> (i32, i32) {
    %c0_i32 = arith.constant 0 : i32
    %c0_i32_0 = arith.constant 0 : i32
    return %arg0, %c0_i32 : i32, i32
  }
  func.func @transform_3(%arg0: i32) -> (i32, i32) {
    %c0_i32 = arith.constant 0 : i32
    %c0_i32_0 = arith.constant 0 : i32
    return %arg0, %c0_i32 : i32, i32
  }
}

</mosaic_0001>

<llo_original>
// kernel: tpu_custom_call.1
$region0: #{tpu_custom_call.1}
  #allocation0 [shape = 'u32[]', space=smem, size = 0x4, offset = 0x4, fixed_abs, tag = 'smem constant byte address 0x4 - core index']
  #allocation1 [shape = 'u32[144,128]{1,0:T(1,128)}', space=vmem, size = 0x12000, scoped, tag = 'internal scratch']
  %s0 = inlined_call_operand.hbm [shape: f32[2,512], index: 0, kind: input, shape index: {}]
  %s1 = inlined_call_operand.hbm [shape: f32[2,512], index: 1, kind: input, shape index: {}]
  %s2 = inlined_call_operand.hbm [shape: f32[2,512], index: 2, kind: input, shape index: {}]
  %s3 = inlined_call_operand.hbm [shape: f32[2,512], index: 3, kind: output, shape index: {}]
  %s4 = sld [smem:[#allocation0]]
  $region34: #{tpu_custom_call.1} parent=0
    _
  %s6 = ssub.s32 1, %s4
  %s7 = scalar_select 0, %s6, %s4
  $region1: #{tpu_custom_call.1} parent=0
    #allocation2 [shape = 'u8[4096]{0}', space=vmem, size = 0x1000, scoped, tag = 'input window, operand 0, single buffered']
    #allocation3 [shape = 's32[1]{0}', space=sflag, size = 0x4, scoped, tag = 'scoped memory for tpu_custom_call.1']
    #allocation4 [shape = 's32[1]{0}', space=sflag, size = 0x4, scoped, tag = 'scoped memory for tpu_custom_call.1']
    #allocation5 [shape = 'u8[4096]{0}', space=vmem, size = 0x1000, scoped, tag = 'input window, operand 1, single buffered']
    #allocation6 [shape = 's32[1]{0}', space=sflag, size = 0x4, scoped, tag = 'scoped memory for tpu_custom_call.1']
    #allocation7 [shape = 'u8[4096]{0}', space=vmem, size = 0x1000, scoped, tag = 'input window, operand 2, single buffered']
    #allocation8 [shape = 'u8[4096]{0}', space=vmem, size = 0x1000, scoped, tag = 'output window, operand 0, single buffered']
    %8 = vsyncpa [#allocation3], 0
    %9 = vsyncpa [#allocation6], 0
    %10 = vsyncpa [#allocation4], 0
    // Predicated region
    $region2: #{tpu_custom_call.1} parent=1 // pred_check
      _
    $region3: #{tpu_custom_call.1} parent=1 // pred_check_branch
      %12 = sbr.rel (0) target = $region5
    $region4: #{tpu_custom_call.1} parent=1 // pred_region
      %s14 = ssub.s32 128, 128
      %15 = vsyncadd [#allocation3], %s14
      %s17 = sshll.u32 [#allocation2], 4
      %s18 = int_to_ptr.vmem [resolvable:$true] %s17
      %20 = dma.hbm_to_vmem [thread:$0]  %s0, 128, %s18, [#allocation3]
    $region5: #{tpu_custom_call.1} parent=1 // pred_fallthru
      _
    // Predicated region
    $region6: #{tpu_custom_call.1} parent=1 // pred_check
      _
    $region7: #{tpu_custom_call.1} parent=1 // pred_check_branch
      %22 = sbr.rel (0) target = $region9
    $region8: #{tpu_custom_call.1} parent=1 // pred_region
      %s24 = ssub.s32 128, 128
      %25 = vsyncadd [#allocation6], %s24
      %s27 = sshll.u32 [#allocation5], 4
      %s28 = int_to_ptr.vmem [resolvable:$true] %s27
      %30 = dma.hbm_to_vmem [thread:$0]  %s1, 128, %s28, [#allocation6]
    $region9: #{tpu_custom_call.1} parent=1 // pred_fallthru
      _
    // Predicated region
    $region10: #{tpu_custom_call.1} parent=1 // pred_check
      _
    $region11: #{tpu_custom_call.1} parent=1 // pred_check_branch
      %32 = sbr.rel (0) target = $region13
    $region12: #{tpu_custom_call.1} parent=1 // pred_region
      %s34 = ssub.s32 128, 128
      %35 = vsyncadd [#allocation6], %s34
      %s37 = sshll.u32 [#allocation7], 4
      %s38 = int_to_ptr.vmem [resolvable:$true] %s37
      %40 = dma.hbm_to_vmem [thread:$0]  %s2, 128, %s38, [#allocation6]
    $region13: #{tpu_custom_call.1} parent=1 // pred_fallthru
      _
    // Predicated region
    $region14: #{tpu_custom_call.1} parent=1 // pred_check
      _
    $region15: #{tpu_custom_call.1} parent=1 // pred_check_branch
      %42 = sbr.rel (0) target = $region17
    $region16: #{tpu_custom_call.1} parent=1 // pred_region
      %43 = dma.done [#allocation3], 128
    $region17: #{tpu_custom_call.1} parent=1 // pred_fallthru
      _
    // Predicated region
    $region18: #{tpu_custom_call.1} parent=1 // pred_check
      _
    $region19: #{tpu_custom_call.1} parent=1 // pred_check_branch
      %45 = sbr.rel (0) target = $region21
    $region20: #{tpu_custom_call.1} parent=1 // pred_region
      %46 = dma.done [#allocation6], 128
    $region21: #{tpu_custom_call.1} parent=1 // pred_fallthru
      _
    // Predicated region
    $region22: #{tpu_custom_call.1} parent=1 // pred_check
      _
    $region23: #{tpu_custom_call.1} parent=1 // pred_check_branch
      %48 = sbr.rel (0) target = $region25
    $region24: #{tpu_custom_call.1} parent=1 // pred_region
      %49 = dma.done [#allocation6], 128
    $region25: #{tpu_custom_call.1} parent=1 // pred_fallthru
      _
    %v50 = vld [vmem:[#allocation2] sm:$0xff]
    %v51 = vld [vmem:[#allocation5] sm:$0xff]
    %v52 = vld [vmem:[#allocation7] sm:$0xff]
    %v53 = vmul.f32 %v51, 0.5
    %v54 = vmul.f32 %v53, 1.442695
    %v55 = vpow.pop %v54
    %v56 = vmul.f32 %v55, %v52
    %v57 = vadd.f32 %v50, %v56
    %58 = vst [vmem:[#allocation8] sm:$0xff] %v57
    // Predicated region
    $region26: #{tpu_custom_call.1} parent=1 // pred_check
      _
    $region27: #{tpu_custom_call.1} parent=1 // pred_check_branch
      %60 = sbr.rel (0) target = $region29
    $region28: #{tpu_custom_call.1} parent=1 // pred_region
      %s62 = ssub.s32 128, 128
      %63 = vsyncadd [#allocation4], %s62
      %s65 = sshll.u32 [#allocation8], 4
      %s66 = int_to_ptr.vmem [resolvable:$true] %s65
      %68 = dma.vmem_to_hbm [thread:$0]  %s66, 128, %s3, [#allocation4]
    $region29: #{tpu_custom_call.1} parent=1 // pred_fallthru
      _
    // Predicated region
    $region30: #{tpu_custom_call.1} parent=1 // pred_check
      _
    $region31: #{tpu_custom_call.1} parent=1 // pred_check_branch
      %70 = sbr.rel (0) target = $region33
    $region32: #{tpu_custom_call.1} parent=1 // pred_region
      %71 = dma.done [#allocation4], 128
    $region33: #{tpu_custom_call.1} parent=1 // pred_fallthru
      _
    %72 = vsyncpa [#allocation3], 1
    %73 = vsyncpa [#allocation6], 1
    %74 = vsyncpa [#allocation4], 1

</llo_original>
